<compile_context>
chip_gen: v5e
topology: v5e:2x2
jax: 0.10.0
libtpu: 0.0.40
codegen_flags: <defaults>
</compile_context>

<pallas_src>
import jax
import jax.numpy as jnp
from jax.experimental import pallas as pl
from jax.experimental.pallas import tpu as pltpu

LANES = 128


def _rational_kernel(coeffs_ref, x_ref, o_ref):
    # coeffs_ref: (4, 2) f32 in SMEM (scalar reads)
    # x_ref / o_ref: (block_rows, 128) tiles in VMEM, original dtype
    x = x_ref[...].astype(jnp.float32)
    c00 = coeffs_ref[0, 0]
    c10 = coeffs_ref[1, 0]
    c20 = coeffs_ref[2, 0]
    c30 = coeffs_ref[3, 0]
    # coeffs[0, 1] is zeroed in forward() -> Q has no cubic term.
    c11 = coeffs_ref[1, 1]
    c21 = coeffs_ref[2, 1]
    c31 = coeffs_ref[3, 1]
    # Horner evaluation (VPU elementwise, f32).
    p = ((c00 * x + c10) * x + c20) * x + c30
    q = (c11 * x + c21) * x + c31
    # Approximate reciprocal on the EUP (otherwise-idle VLIW slot) + one
    # Newton-Raphson step in f32 to recover ~full precision for 1e-5 checks.
    r = pl.reciprocal(q, approx=True)
    r = r * (2.0 - q * r)
    o_ref[...] = (p * r).astype(o_ref.dtype)


def _round_up(a: int, b: int) -> int:
    return ((a + b - 1) // b) * b


def _generation_policy():
    """(max_block_bytes, min_grid_steps, vmem_limit_bytes) per TPU generation."""
    try:
        kind = jax.devices()[0].device_kind.lower()
    except Exception:  # no backend info -> conservative defaults
        kind = ""
    if "7" in kind:
        # v7x: 2 TCs/chip, 64 MiB VMEM/TC -> smaller blocks, keep >=4 steps so
        # the "parallel" grid axis actually shards across both cores.
        return 6 * 1024 * 1024, 4, 40 * 1024 * 1024
    # v5e/v6e: single TC, 128 MiB physical VMEM -> run in 1-2 big blocks.
    return 8 * 1024 * 1024, 1, 64 * 1024 * 1024


def _run_slab(slab: jax.Array, coeffs: jax.Array, dtype) -> jax.Array:
    """Run the kernel over a (rows, 128) lane-dense slab."""
    rows = slab.shape[0]
    max_block_bytes, min_grid_steps, vmem_limit = _generation_policy()

    itemsize = jnp.dtype(dtype).itemsize
    sublane = max(8, 32 // itemsize)          # f32:8, bf16:16, int8/fp8:32
    max_block_rows = max(
        sublane, (max_block_bytes // (LANES * itemsize)) // sublane * sublane)
    target_rows = max(sublane,
                      _round_up(pl.cdiv(rows, min_grid_steps), sublane))
    block_rows = min(max_block_rows, target_rows)
    grid = (pl.cdiv(rows, block_rows),)

    return pl.pallas_call(
        _rational_kernel,
        out_shape=jax.ShapeDtypeStruct((rows, LANES), dtype),
        grid=grid,
        in_specs=[
            pl.BlockSpec(memory_space=pltpu.MemorySpace.SMEM),  # coeffs (4, 2)
            pl.BlockSpec((block_rows, LANES), lambda i: (i, 0)),
        ],
        out_specs=pl.BlockSpec((block_rows, LANES), lambda i: (i, 0)),
        compiler_params=pltpu.CompilerParams(
            dimension_semantics=("parallel",),
            vmem_limit_bytes=vmem_limit),
    )(coeffs, slab)


def rational(x: jax.Array, coeffs: jax.Array) -> jax.Array:
    """Apply the rational activation elementwise. x: any shape / dtype."""
    orig_shape = x.shape
    dtype = x.dtype
    n = x.size
    if n == 0:
        return x

    # Mirror forward(): self.coeffs.data[0, 1].zero_()
    coeffs = coeffs.astype(jnp.float32).at[0, 1].set(0.0)

    flat = x.reshape(-1)
    n_main = (n // LANES) * LANES
    tail_n = n - n_main

    pieces = []
    if n_main > 0:
        slab = flat[:n_main].reshape(n_main // LANES, LANES)
        pieces.append(_run_slab(slab, coeffs, dtype).reshape(-1))
    if tail_n > 0:
        # Ragged case: pad ONLY the <128-element tail chunk (tiny copy), never
        # the whole tensor.  Dead pad lanes may compute garbage; sliced away.
        tail = jnp.pad(flat[n_main:], (0, LANES - tail_n)).reshape(1, LANES)
        pieces.append(_run_slab(tail, coeffs, dtype).reshape(-1)[:tail_n])

    out = pieces[0] if len(pieces) == 1 else jnp.concatenate(pieces)
    return out.reshape(orig_shape)


def init_coeffs() -> jax.Array:
    # Deterministic init exactly as in Rational.reset_parameters().
    return jnp.array(
        [[1.1915, 0.0],
         [1.5957, 2.383],
         [0.5,    0.0],
         [0.0218, 1.0]], dtype=jnp.float32)


def _reference(x, coeffs):
    # Pure-JAX reference mirroring the PyTorch forward exactly.
    coeffs = coeffs.astype(jnp.float32).at[0, 1].set(0.0)
    exp = jnp.array([3.0, 2.0, 1.0, 0.0], dtype=jnp.float32)
    X = jnp.power(x.astype(jnp.float32)[..., None], exp)   # (..., 4)
    PQ = X @ coeffs                                         # (..., 2)
    return (PQ[..., 0] / PQ[..., 1]).astype(x.dtype)


if __name__ == "__main__":
    key = jax.random.PRNGKey(0)
    # NCHW input, like a conv feature map: batch=2, channels=4, spatial=16.
    x = jax.random.normal(key, (2, 4, 16, 16), dtype=jnp.float32)
    coeffs = init_coeffs()

    out = rational(x, coeffs)
    out = jax.block_until_ready(out)

    ref = _reference(x, coeffs)
    assert out.shape == x.shape and out.dtype == x.dtype
    assert jnp.allclose(out, ref, rtol=1e-5, atol=1e-5), (
        float(jnp.max(jnp.abs(out - ref))))

    print("KERNEL_OK")
</pallas_src>

<mosaic_0001>
module attributes {stable_mosaic.version = 11 : i64} {
  func.func @_rational_kernel(%arg0: i32, %arg1: memref<4x2xf32, #tpu.memory_space<smem>>, %arg2: memref<16x128xf32, #tpu.memory_space<vmem>>, %arg3: memref<16x128xf32, #tpu.memory_space<vmem>>) attributes {dimension_semantics = [#tpu.dimension_semantics<parallel>], iteration_bounds = array<i64: 1>, scalar_prefetch = 0 : i64, scratch_operands = 0 : i64, tpu.core_type = #tpu.core_type<tc>, window_params = [{transform_indices = @transform_0, window_bounds = array<i64: 4, 2>}, {transform_indices = @transform_1, window_bounds = array<i64: 16, 128>}, {transform_indices = @transform_2, window_bounds = array<i64: 16, 128>}]} {
    %c0 = arith.constant 0 : index
    %c0_0 = arith.constant 0 : index
    %0 = vector.load %arg2[%c0, %c0_0] : memref<16x128xf32, #tpu.memory_space<vmem>>, vector<16x128xf32>
    %c0_1 = arith.constant 0 : index
    %c0_2 = arith.constant 0 : index
    %1 = memref.load %arg1[%c0_1, %c0_2] : memref<4x2xf32, #tpu.memory_space<smem>>
    %c1 = arith.constant 1 : index
    %c0_3 = arith.constant 0 : index
    %2 = memref.load %arg1[%c1, %c0_3] : memref<4x2xf32, #tpu.memory_space<smem>>
    %c2 = arith.constant 2 : index
    %c0_4 = arith.constant 0 : index
    %3 = memref.load %arg1[%c2, %c0_4] : memref<4x2xf32, #tpu.memory_space<smem>>
    %c3 = arith.constant 3 : index
    %c0_5 = arith.constant 0 : index
    %4 = memref.load %arg1[%c3, %c0_5] : memref<4x2xf32, #tpu.memory_space<smem>>
    %c1_6 = arith.constant 1 : index
    %c1_7 = arith.constant 1 : index
    %5 = memref.load %arg1[%c1_6, %c1_7] : memref<4x2xf32, #tpu.memory_space<smem>>
    %c2_8 = arith.constant 2 : index
    %c1_9 = arith.constant 1 : index
    %6 = memref.load %arg1[%c2_8, %c1_9] : memref<4x2xf32, #tpu.memory_space<smem>>
    %c3_10 = arith.constant 3 : index
    %c1_11 = arith.constant 1 : index
    %7 = memref.load %arg1[%c3_10, %c1_11] : memref<4x2xf32, #tpu.memory_space<smem>>
    %8 = vector.broadcast %1 : f32 to vector<16x128xf32>
    %9 = arith.mulf %8, %0 : vector<16x128xf32>
    %10 = vector.broadcast %2 : f32 to vector<16x128xf32>
    %11 = arith.addf %9, %10 : vector<16x128xf32>
    %12 = arith.mulf %11, %0 : vector<16x128xf32>
    %13 = vector.broadcast %3 : f32 to vector<16x128xf32>
    %14 = arith.addf %12, %13 : vector<16x128xf32>
    %15 = arith.mulf %14, %0 : vector<16x128xf32>
    %16 = vector.broadcast %4 : f32 to vector<16x128xf32>
    %17 = arith.addf %15, %16 : vector<16x128xf32>
    %18 = vector.broadcast %5 : f32 to vector<16x128xf32>
    %19 = arith.mulf %18, %0 : vector<16x128xf32>
    %20 = vector.broadcast %6 : f32 to vector<16x128xf32>
    %21 = arith.addf %19, %20 : vector<16x128xf32>
    %22 = arith.mulf %21, %0 : vector<16x128xf32>
    %23 = vector.broadcast %7 : f32 to vector<16x128xf32>
    %24 = arith.addf %22, %23 : vector<16x128xf32>
    %25 = tpu.reciprocal %24 {approx = true} : vector<16x128xf32> -> vector<16x128xf32>
    %26 = arith.mulf %24, %25 : vector<16x128xf32>
    %cst = arith.constant 2.000000e+00 : f32
    %27 = vector.broadcast %cst : f32 to vector<16x128xf32>
    %28 = arith.subf %27, %26 : vector<16x128xf32>
    %29 = arith.mulf %25, %28 : vector<16x128xf32>
    %30 = arith.mulf %17, %29 : vector<16x128xf32>
    %c0_12 = arith.constant 0 : index
    %c0_13 = arith.constant 0 : index
    %31 = vector.load %arg3[%c0_12, %c0_13] : memref<16x128xf32, #tpu.memory_space<vmem>>, vector<16x128xf32>
    tpu.vector_store %arg3[%c0_12, %c0_13], %30 {strides = array<i32>} : memref<16x128xf32, #tpu.memory_space<vmem>>, vector<16x128xf32>,
    return
  }
  func.func @transform_0(%arg0: i32) -> (i32, i32) {
    %c0_i32 = arith.constant 0 : i32
    %c0_i32_0 = arith.constant 0 : i32
    %c0_i32_1 = arith.constant 0 : i32
    return %c0_i32, %c0_i32_0 : i32, i32
  }
  func.func @transform_1(%arg0: i32) -> (i32, i32) {
    %c0_i32 = arith.constant 0 : i32
    %c0_i32_0 = arith.constant 0 : i32
    return %arg0, %c0_i32 : i32, i32
  }
  func.func @transform_2(%arg0: i32) -> (i32, i32) {
    %c0_i32 = arith.constant 0 : i32
    %c0_i32_0 = arith.constant 0 : i32
    return %arg0, %c0_i32 : i32, i32
  }
}

</mosaic_0001>

<llo_original>
// kernel: tpu_custom_call.1
$region0: #{tpu_custom_call.1}
  #allocation0 [shape = 'u32[]', space=smem, size = 0x4, offset = 0x4, fixed_abs, tag = 'smem constant byte address 0x4 - core index']
  #allocation1 [shape = 'u32[72,128]{1,0:T(1,128)}', space=vmem, size = 0x9000, scoped, tag = 'internal scratch']
  %s0 = inlined_call_operand.vmem [shape: f32[4,2], index: 0, kind: input, shape index: {}]
  %s1 = inlined_call_operand.hbm [shape: f32[16,128], index: 1, kind: input, shape index: {}]
  %s2 = inlined_call_operand.hbm [shape: f32[16,128], index: 2, kind: output, shape index: {}]
  %s3 = sld [smem:[#allocation0]]
  $region26: #{tpu_custom_call.1} parent=0
    _
  %s5 = ssub.s32 1, %s3
  %s6 = scalar_select 0, %s5, %s3
  $region1: #{tpu_custom_call.1} parent=0
    #allocation2 [shape = 'u8[2048]{0}', space=smem, size = 0x800, scoped, tag = 'input window, operand 0, single buffered']
    #allocation3 [shape = 's32[1]{0}', space=sflag, size = 0x4, scoped, tag = 'scoped memory for tpu_custom_call.1']
    #allocation4 [shape = 's32[1]{0}', space=sflag, size = 0x4, scoped, tag = 'scoped memory for tpu_custom_call.1']
    #allocation5 [shape = 's32[1]{0}', space=sflag, size = 0x4, scoped, tag = 'scoped memory for tpu_custom_call.1']
    #allocation6 [shape = 'u8[8192]{0}', space=vmem, size = 0x2000, scoped, tag = 'input window, operand 1, single buffered']
    #allocation7 [shape = 'u8[8192]{0}', space=vmem, size = 0x2000, scoped, tag = 'output window, operand 0, single buffered']
    %7 = vsyncpa [#allocation5], 0
    %8 = vsyncpa [#allocation3], 0
    %9 = vsyncpa [#allocation4], 0
    // Predicated region
    $region2: #{tpu_custom_call.1} parent=1 // pred_check
      _
    $region3: #{tpu_custom_call.1} parent=1 // pred_check_branch
      %11 = sbr.rel (0) target = $region5
    $region4: #{tpu_custom_call.1} parent=1 // pred_region
      %13 = vsyncadd [#allocation5], 0
      %s15 = sshll.u32 %s0, 4
      %s16 = int_to_ptr.vmem [resolvable:$true] %s15
      %18 = dma.vmem_to_smem %s16, 64, [#allocation2], [#allocation5]
    $region5: #{tpu_custom_call.1} parent=1 // pred_fallthru
      _
    // Predicated region
    $region6: #{tpu_custom_call.1} parent=1 // pred_check
      _
    $region7: #{tpu_custom_call.1} parent=1 // pred_check_branch
      %20 = sbr.rel (0) target = $region9
    $region8: #{tpu_custom_call.1} parent=1 // pred_region
      %22 = vsyncadd [#allocation3], 0
      %s23 = sshll.u32 %s1, 4
      %s24 = int_to_ptr.hbm [resolvable:$true] %s23
      %s25 = sshll.u32 [#allocation6], 4
      %s26 = int_to_ptr.vmem [resolvable:$true] %s25
      %31 = dma.hbm_to_vmem [thread:$0]  %s24, 256, %s26, [#allocation3], 128, 128, 8
    $region9: #{tpu_custom_call.1} parent=1 // pred_fallthru
      _
    // Predicated region
    $region10: #{tpu_custom_call.1} parent=1 // pred_check
      _
    $region11: #{tpu_custom_call.1} parent=1 // pred_check_branch
      %33 = sbr.rel (0) target = $region13
    $region12: #{tpu_custom_call.1} parent=1 // pred_region
      %35 = dma.done [#allocation5], 64
    $region13: #{tpu_custom_call.1} parent=1 // pred_fallthru
      _
    // Predicated region
    $region14: #{tpu_custom_call.1} parent=1 // pred_check
      _
    $region15: #{tpu_custom_call.1} parent=1 // pred_check_branch
      %37 = sbr.rel (0) target = $region17
    $region16: #{tpu_custom_call.1} parent=1 // pred_region
      %39 = dma.done [#allocation3], 256
    $region17: #{tpu_custom_call.1} parent=1 // pred_fallthru
      _
    %40 = sfence
    %v41 = vld [vmem:[#allocation6] sm:$0xff]
    %v42 = vld [vmem:[#allocation6 + $0x8] sm:$0xff]
    %s43 = sld [smem:[#allocation2]]
    %s44 = sld [smem:[#allocation2 + $0x80]]
    %s45 = sld [smem:[#allocation2 + $0x100]]
    %s46 = sld [smem:[#allocation2 + $0x180]]
    %s47 = sld [smem:[#allocation2 + $0x81]]
    %s48 = sld [smem:[#allocation2 + $0x101]]
    %s49 = sld [smem:[#allocation2 + $0x181]]
    %v50 = vstv %s43
    %v51 = vmul.f32 %v50, %v41
    %v52 = vmul.f32 %v50, %v42
    %v53 = vstv %s44
    %v54 = vadd.f32 %v51, %v53
    %v55 = vadd.f32 %v52, %v53
    %v56 = vmul.f32 %v54, %v41
    %v57 = vmul.f32 %v55, %v42
    %v58 = vstv %s45
    %v59 = vadd.f32 %v56, %v58
    %v60 = vadd.f32 %v57, %v58
    %v61 = vmul.f32 %v59, %v41
    %v62 = vmul.f32 %v60, %v42
    %v63 = vstv %s46
    %v64 = vadd.f32 %v61, %v63
    %v65 = vadd.f32 %v62, %v63
    %v66 = vstv %s47
    %v67 = vmul.f32 %v66, %v41
    %v68 = vmul.f32 %v66, %v42
    %v69 = vstv %s48
    %v70 = vadd.f32 %v67, %v69
    %v71 = vadd.f32 %v68, %v69
    %v72 = vmul.f32 %v70, %v41
    %v73 = vmul.f32 %v71, %v42
    %v74 = vstv %s49
    %v75 = vadd.f32 %v72, %v74
    %v76 = vadd.f32 %v73, %v74
    %v77 = vrcp.pop %v75
    %v78 = vrcp.pop %v76
    %v79 = vmul.f32 %v75, %v77
    %v80 = vmul.f32 %v76, %v78
    %v81 = vsub.f32 2.0, %v79
    %v82 = vsub.f32 2.0, %v80
    %v83 = vmul.f32 %v77, %v81
    %v84 = vmul.f32 %v78, %v82
    %v85 = vmul.f32 %v64, %v83
    %v86 = vmul.f32 %v65, %v84
    %87 = vst [vmem:[#allocation7] sm:$0xff] %v85
    %88 = vst [vmem:[#allocation7 + $0x8] sm:$0xff] %v86
    // Predicated region
    $region18: #{tpu_custom_call.1} parent=1 // pred_check
      _
    $region19: #{tpu_custom_call.1} parent=1 // pred_check_branch
      %90 = sbr.rel (0) target = $region21
    $region20: #{tpu_custom_call.1} parent=1 // pred_region
      %92 = vsyncadd [#allocation4], 0
      %s93 = sshll.u32 [#allocation7], 4
      %s94 = int_to_ptr.vmem [resolvable:$true] %s93
      %s95 = sshll.u32 %s2, 4
      %s96 = int_to_ptr.hbm [resolvable:$true] %s95
      %101 = dma.vmem_to_hbm [thread:$0]  %s94, 256, %s96, [#allocation4], 128, 128, 8
    $region21: #{tpu_custom_call.1} parent=1 // pred_fallthru
      _
    // Predicated region
    $region22: #{tpu_custom_call.1} parent=1 // pred_check
      _
    $region23: #{tpu_custom_call.1} parent=1 // pred_check_branch
      %103 = sbr.rel (0) target = $region25
    $region24: #{tpu_custom_call.1} parent=1 // pred_region
      %105 = dma.done [#allocation4], 256
    $region25: #{tpu_custom_call.1} parent=1 // pred_fallthru
      _
    %106 = vsyncpa [#allocation3], 1
    %107 = vsyncpa [#allocation4], 1
    %108 = vsyncpa [#allocation5], 1

</llo_original>
